<compile_context>
chip_gen: v6e
topology: v6e:2x2x1
jax: 0.10.0
libtpu: 0.0.40
codegen_flags: <defaults>
</compile_context>

<pallas_src>
import functools

import jax
import jax.numpy as jnp
from jax.experimental import pallas as pl
from jax.experimental.pallas import tpu as pltpu

_LANES = 128
_SUBLANES = 8
_TILE = _LANES * _SUBLANES  # 1024 elements == one (8,128) f32 vreg tile


def _partial_sq_err_kernel(p_ref, t_ref, out_ref, *, rows_per_block, rows_total):
    # p_ref / t_ref: (rows_per_block, 128) tiles; out_ref: (8, 128) per-block partial.
    diff = p_ref[...].astype(jnp.float32) - t_ref[...].astype(jnp.float32)
    sq = diff * diff

    if rows_total % rows_per_block != 0:
        # The last grid block overhangs the array; its overhang rows hold
        # unspecified data -> zero them before accumulating.  Static Python
        # condition: no masking code is emitted when the grid divides evenly.
        i = pl.program_id(0)
        valid_rows = rows_total - i * rows_per_block  # >= rows_per_block except last
        row_ids = jax.lax.broadcasted_iota(jnp.int32, (rows_per_block, 1), 0)
        sq = jnp.where(row_ids < valid_rows, sq, 0.0)

    # Fold rows onto a single (8, 128) vreg-shaped slab using only VPU adds
    # (the reshape is tile-aligned, no relayout).  The single cross-lane
    # reduce is deferred to the wrapper on a tiny array.
    out_ref[...] = jnp.sum(
        sq.reshape(rows_per_block // _SUBLANES, _SUBLANES, _LANES), axis=0
    )


def my_loss_func(prob: jax.Array, target: jax.Array, *, rows_per_block: int = 4096) -> jax.Array:
    """Pallas equivalent of MyLossFunc.forward: mean(sum((prob-target)**2, axis=2))."""
    assert prob.shape == target.shape and prob.ndim >= 3
    shape = prob.shape
    total_elems = 1
    for s in shape:
        total_elems *= int(s)
    # mean(sum(loss, 2)) == total_sum / (numel / shape[2])
    divisor = total_elems // int(shape[2])

    # Round element count up to a multiple of one (8,128) tile so the
    # lane-dense view always has >= 8 rows and a sublane-aligned row count.
    padded_elems = pl.cdiv(total_elems, _TILE) * _TILE
    rows_total = padded_elems // _LANES  # multiple of 8, >= 8

    rows_per_block = int(rows_per_block)
    rows_per_block = max(_SUBLANES, min(rows_per_block, rows_total))
    rows_per_block = (rows_per_block // _SUBLANES) * _SUBLANES  # multiple of 8, <= rows_total

    grid = pl.cdiv(rows_total, rows_per_block)

    def _lane_dense(x):
        xf = x.reshape(-1)
        if padded_elems != total_elems:
            # Zero padding on BOTH operands contributes (0 - 0)^2 == 0.
            xf = jnp.pad(xf, (0, padded_elems - total_elems))
        return xf.reshape(rows_total, _LANES)

    p2 = _lane_dense(prob)    # keep native dtype in HBM; upcast inside kernel
    t2 = _lane_dense(target)

    kernel = functools.partial(
        _partial_sq_err_kernel,
        rows_per_block=rows_per_block,
        rows_total=rows_total,
    )

    in_bytes = 2 * rows_total * _LANES * p2.dtype.itemsize
    out_bytes = grid * _SUBLANES * _LANES * 4
    cost = pl.CostEstimate(
        flops=3 * padded_elems,
        transcendentals=0,
        bytes_accessed=in_bytes + out_bytes,
    )

    partials = pl.pallas_call(
        kernel,
        out_shape=jax.ShapeDtypeStruct((grid, _SUBLANES, _LANES), jnp.float32),
        grid_spec=pltpu.PrefetchScalarGridSpec(
            num_scalar_prefetch=0,
            grid=(grid,),
            in_specs=[
                pl.BlockSpec((rows_per_block, _LANES), lambda i: (i, 0)),
                pl.BlockSpec((rows_per_block, _LANES), lambda i: (i, 0)),
            ],
            out_specs=pl.BlockSpec((None, _SUBLANES, _LANES), lambda i: (i, 0, 0)),
        ),
        compiler_params=pltpu.CompilerParams(
            dimension_semantics=("parallel",),      # independent per-block partials
            vmem_limit_bytes=48 * 1024 * 1024,      # headroom on v5e/v6e/v7x
        ),
        cost_estimate=cost,
    )(p2, t2)

    # Final tiny reduce + divide in the wrapper (grid * 4 KiB of partials).
    return (jnp.sum(partials) / jnp.float32(divisor)).astype(jnp.float32)


if __name__ == "__main__":
    key = jax.random.PRNGKey(0)
    k1, k2 = jax.random.split(key)

    # Small shapes consistent with the module's forward.
    B, N, D = 2, 8, 32
    prob = jax.random.uniform(k1, (B, N, D), dtype=jnp.float32)
    target = jax.random.uniform(k2, (B, N, D), dtype=jnp.float32)

    loss = my_loss_func(prob, target)
    jax.block_until_ready(loss)
    ref = jnp.mean(jnp.sum((prob - target) ** 2, axis=2))
    assert jnp.allclose(loss, ref, rtol=1e-5, atol=1e-5), (loss, ref)

    # Shape that exercises the element-padding path (total not a multiple of 1024).
    k3, k4 = jax.random.split(k2)
    prob2 = jax.random.uniform(k3, (3, 7, 50), dtype=jnp.float32)
    target2 = jax.random.uniform(k4, (3, 7, 50), dtype=jnp.float32)
    loss2 = my_loss_func(prob2, target2)
    jax.block_until_ready(loss2)
    ref2 = jnp.mean(jnp.sum((prob2 - target2) ** 2, axis=2))
    assert jnp.allclose(loss2, ref2, rtol=1e-5, atol=1e-5), (loss2, ref2)

    # Shape + block size that exercise the ragged-last-block masking path
    # (64 rows, 24 rows per block -> grid of 3 with an 8-row overhang).
    k5, k6 = jax.random.split(k4)
    prob3 = jax.random.uniform(k5, (4, 16, 128), dtype=jnp.float32)
    target3 = jax.random.uniform(k6, (4, 16, 128), dtype=jnp.float32)
    loss3 = my_loss_func(prob3, target3, rows_per_block=24)
    jax.block_until_ready(loss3)
    ref3 = jnp.mean(jnp.sum((prob3 - target3) ** 2, axis=2))
    assert jnp.allclose(loss3, ref3, rtol=1e-5, atol=1e-5), (loss3, ref3)

    print("KERNEL_OK")
</pallas_src>

<mosaic_0001>
module attributes {stable_mosaic.version = 11 : i64} {
  func.func @_partial_sq_err_kernel(%arg0: i32, %arg1: memref<8x128xf32, #tpu.memory_space<vmem>>, %arg2: memref<8x128xf32, #tpu.memory_space<vmem>>, %arg3: memref<1x8x128xf32, #tpu.memory_space<vmem>>) attributes {dimension_semantics = [#tpu.dimension_semantics<parallel>], iteration_bounds = array<i64: 1>, scalar_prefetch = 0 : i64, scratch_operands = 0 : i64, tpu.core_type = #tpu.core_type<tc>, window_params = [{transform_indices = @transform_0, window_bounds = array<i64: 8, 128>}, {transform_indices = @transform_1, window_bounds = array<i64: 8, 128>}, {transform_indices = @transform_2, window_bounds = array<i64: 1, 8, 128>}]} {
    %c0 = arith.constant 0 : index
    %c0_0 = arith.constant 0 : index
    %0 = vector.load %arg1[%c0, %c0_0] : memref<8x128xf32, #tpu.memory_space<vmem>>, vector<8x128xf32>
    %c0_1 = arith.constant 0 : index
    %c0_2 = arith.constant 0 : index
    %1 = vector.load %arg2[%c0_1, %c0_2] : memref<8x128xf32, #tpu.memory_space<vmem>>, vector<8x128xf32>
    %2 = arith.subf %0, %1 : vector<8x128xf32>
    %3 = arith.mulf %2, %2 : vector<8x128xf32>
    %4 = vector.shape_cast %3 : vector<8x128xf32> to vector<1x8x128xf32>
    %cst = arith.constant dense<0.000000e+00> : vector<8x128xf32>
    %5 = vector.multi_reduction <add>, %4, %cst [0] : vector<1x8x128xf32> to vector<8x128xf32>
    %c0_3 = arith.constant 0 : index
    %c0_4 = arith.constant 0 : index
    %c0_5 = arith.constant 0 : index
    %6 = vector.load %arg3[%c0_3, %c0_4, %c0_5] : memref<1x8x128xf32, #tpu.memory_space<vmem>>, vector<1x8x128xf32>
    %7 = vector.shape_cast %6 : vector<1x8x128xf32> to vector<8x128xf32>
    %8 = vector.shape_cast %5 : vector<8x128xf32> to vector<1x8x128xf32>
    tpu.vector_store %arg3[%c0_3, %c0_4, %c0_5], %8 {strides = array<i32>} : memref<1x8x128xf32, #tpu.memory_space<vmem>>, vector<1x8x128xf32>,
    return
  }
  func.func @transform_0(%arg0: i32) -> (i32, i32) {
    %c0_i32 = arith.constant 0 : i32
    %c0_i32_0 = arith.constant 0 : i32
    return %arg0, %c0_i32 : i32, i32
  }
  func.func @transform_1(%arg0: i32) -> (i32, i32) {
    %c0_i32 = arith.constant 0 : i32
    %c0_i32_0 = arith.constant 0 : i32
    return %arg0, %c0_i32 : i32, i32
  }
  func.func @transform_2(%arg0: i32) -> (i32, i32, i32) {
    %c0_i32 = arith.constant 0 : i32
    %c0_i32_0 = arith.constant 0 : i32
    %c0_i32_1 = arith.constant 0 : i32
    return %arg0, %c0_i32, %c0_i32_0 : i32, i32, i32
  }
}

</mosaic_0001>

<llo_original>
// kernel: tpu_custom_call.1
$region0: #{tpu_custom_call.1}
  #allocation0 [shape = 'u32[]', space=smem, size = 0x4, offset = 0x4, fixed_abs, tag = 'smem constant byte address 0x4 - core index']
  #allocation1 [shape = 'u32[144,128]{1,0:T(1,128)}', space=vmem, size = 0x12000, scoped, tag = 'internal scratch']
  %s0 = inlined_call_operand.hbm [shape: f32[8,128], index: 0, kind: input, shape index: {}]
  %s1 = inlined_call_operand.hbm [shape: f32[8,128], index: 1, kind: input, shape index: {}]
  %s2 = inlined_call_operand.hbm [shape: f32[1,8,128], index: 2, kind: output, shape index: {}]
  %s3 = sld [smem:[#allocation0]]
  $region26: #{tpu_custom_call.1} parent=0
    _
  %s5 = ssub.s32 1, %s3
  %s6 = scalar_select 0, %s5, %s3
  $region1: #{tpu_custom_call.1} parent=0
    #allocation2 [shape = 'u8[4096]{0}', space=vmem, size = 0x1000, scoped, tag = 'input window, operand 0, single buffered']
    #allocation3 [shape = 's32[1]{0}', space=sflag, size = 0x4, scoped, tag = 'scoped memory for tpu_custom_call.1']
    #allocation4 [shape = 's32[1]{0}', space=sflag, size = 0x4, scoped, tag = 'scoped memory for tpu_custom_call.1']
    #allocation5 [shape = 'u8[4096]{0}', space=vmem, size = 0x1000, scoped, tag = 'input window, operand 1, single buffered']
    #allocation6 [shape = 's32[1]{0}', space=sflag, size = 0x4, scoped, tag = 'scoped memory for tpu_custom_call.1']
    #allocation7 [shape = 'u8[4096]{0}', space=vmem, size = 0x1000, scoped, tag = 'output window, operand 0, single buffered']
    %7 = vsyncpa [#allocation3], 0
    %8 = vsyncpa [#allocation6], 0
    %9 = vsyncpa [#allocation4], 0
    // Predicated region
    $region2: #{tpu_custom_call.1} parent=1 // pred_check
      _
    $region3: #{tpu_custom_call.1} parent=1 // pred_check_branch
      %11 = sbr.rel (0) target = $region5
    $region4: #{tpu_custom_call.1} parent=1 // pred_region
      %s13 = ssub.s32 128, 128
      %14 = vsyncadd [#allocation3], %s13
      %s16 = sshll.u32 [#allocation2], 4
      %s17 = int_to_ptr.vmem [resolvable:$true] %s16
      %19 = dma.hbm_to_vmem [thread:$0]  %s0, 128, %s17, [#allocation3]
    $region5: #{tpu_custom_call.1} parent=1 // pred_fallthru
      _
    // Predicated region
    $region6: #{tpu_custom_call.1} parent=1 // pred_check
      _
    $region7: #{tpu_custom_call.1} parent=1 // pred_check_branch
      %21 = sbr.rel (0) target = $region9
    $region8: #{tpu_custom_call.1} parent=1 // pred_region
      %s23 = ssub.s32 128, 128
      %24 = vsyncadd [#allocation6], %s23
      %s26 = sshll.u32 [#allocation5], 4
      %s27 = int_to_ptr.vmem [resolvable:$true] %s26
      %29 = dma.hbm_to_vmem [thread:$0]  %s1, 128, %s27, [#allocation6]
    $region9: #{tpu_custom_call.1} parent=1 // pred_fallthru
      _
    // Predicated region
    $region10: #{tpu_custom_call.1} parent=1 // pred_check
      _
    $region11: #{tpu_custom_call.1} parent=1 // pred_check_branch
      %31 = sbr.rel (0) target = $region13
    $region12: #{tpu_custom_call.1} parent=1 // pred_region
      %32 = dma.done [#allocation3], 128
    $region13: #{tpu_custom_call.1} parent=1 // pred_fallthru
      _
    // Predicated region
    $region14: #{tpu_custom_call.1} parent=1 // pred_check
      _
    $region15: #{tpu_custom_call.1} parent=1 // pred_check_branch
      %34 = sbr.rel (0) target = $region17
    $region16: #{tpu_custom_call.1} parent=1 // pred_region
      %35 = dma.done [#allocation6], 128
    $region17: #{tpu_custom_call.1} parent=1 // pred_fallthru
      _
    %v36 = vld [vmem:[#allocation2] sm:$0xff]
    %v37 = vld [vmem:[#allocation5] sm:$0xff]
    %v38 = vsub.f32 %v36, %v37
    %v39 = vmul.f32 %v38, %v38
    %v40 = vadd.f32 %v39, 0.0
    %41 = vst [vmem:[#allocation7] sm:$0xff] %v40
    // Predicated region
    $region18: #{tpu_custom_call.1} parent=1 // pred_check
      _
    $region19: #{tpu_custom_call.1} parent=1 // pred_check_branch
      %43 = sbr.rel (0) target = $region21
    $region20: #{tpu_custom_call.1} parent=1 // pred_region
      %s45 = ssub.s32 128, 128
      %46 = vsyncadd [#allocation4], %s45
      %s48 = sshll.u32 [#allocation7], 4
      %s49 = int_to_ptr.vmem [resolvable:$true] %s48
      %51 = dma.vmem_to_hbm [thread:$0]  %s49, 128, %s2, [#allocation4]
    $region21: #{tpu_custom_call.1} parent=1 // pred_fallthru
      _
    // Predicated region
    $region22: #{tpu_custom_call.1} parent=1 // pred_check
      _
    $region23: #{tpu_custom_call.1} parent=1 // pred_check_branch
      %53 = sbr.rel (0) target = $region25
    $region24: #{tpu_custom_call.1} parent=1 // pred_region
      %54 = dma.done [#allocation4], 128
    $region25: #{tpu_custom_call.1} parent=1 // pred_fallthru
      _
    %55 = vsyncpa [#allocation3], 1
    %56 = vsyncpa [#allocation6], 1
    %57 = vsyncpa [#allocation4], 1

</llo_original>
